<compile_context>
chip_gen: v5e
topology: v5e:2x2
jax: 0.10.0
libtpu: 0.0.40
codegen_flags: <defaults>
</compile_context>

<pallas_src>
import jax
import jax.numpy as jnp
from jax.experimental import pallas as pl
from jax.experimental.pallas import tpu as pltpu


def _eltwise_scalars_kernel(x_ref, o_ref):
    # y = -1.5 + 2.5 * x, whole tile at once (VPU elementwise).
    o_ref[...] = -1.5 + 2.5 * x_ref[...]


def eltwise_scalars(x: jax.Array) -> jax.Array:
    """Computes -1.5 + 2.5 * x with a Pallas TPU kernel (float inputs)."""
    orig_shape = x.shape
    n = x.size

    # Widest lane-dense last dim that divides n -> no pad/slice copies.
    lanes = None
    for cand in (1024, 512, 256, 128):
        if n % cand == 0:
            lanes = cand
            break

    flat = x.reshape(-1)
    padded = False
    if lanes is None:
        # Unlucky size: pad minimally to a multiple of 128 lanes.
        lanes = 128
        padded_n = pl.cdiv(n, lanes) * lanes
        flat = jnp.pad(flat, (0, padded_n - n))
        padded = True
    else:
        padded_n = n

    rows = padded_n // lanes
    x2d = flat.reshape(rows, lanes)

    # Target ~4 MiB blocks: 2 inputs-of-pipeline buffers + 2 output buffers
    # = 16 MiB live, comfortably inside a 32 MiB scoped-VMEM limit on all
    # generations (v5e/v6e/v7x). Ragged last block handled via pl.cdiv.
    bytes_per_elem = x2d.dtype.itemsize
    target_block_bytes = 4 * 1024 * 1024
    block_rows = max(8, target_block_bytes // (lanes * bytes_per_elem))
    if block_rows >= rows:
        block_rows = rows  # full-extent block (legal even if not 8-aligned)
    grid = (pl.cdiv(rows, block_rows),)

    out2d = pl.pallas_call(
        _eltwise_scalars_kernel,
        out_shape=jax.ShapeDtypeStruct((rows, lanes), x2d.dtype),
        grid=grid,
        in_specs=[pl.BlockSpec((block_rows, lanes), lambda i: (i, 0))],
        out_specs=pl.BlockSpec((block_rows, lanes), lambda i: (i, 0)),
        compiler_params=pltpu.CompilerParams(
            dimension_semantics=("parallel",),   # shards across TCs on v7x
            vmem_limit_bytes=32 << 20,
        ),
    )(x2d)

    out = out2d.reshape(-1)
    if padded:
        out = out[:n]
    return out.reshape(orig_shape)


if __name__ == "__main__":
    key = jax.random.PRNGKey(0)
    # NCHW input consistent with the ONNX test-data module usage.
    x = jax.random.normal(key, (2, 4, 16, 16), dtype=jnp.float32)

    y = eltwise_scalars(x)
    y = jax.block_until_ready(y)

    # Reference check against plain JAX.
    y_ref = -1.5 + 2.5 * x
    assert y.shape == x.shape and y.dtype == x.dtype
    assert jnp.allclose(y, y_ref, atol=1e-6, rtol=1e-6)

    # Also exercise a larger, oddly-sized input to cover the ragged/padded path.
    x2 = jax.random.normal(jax.random.PRNGKey(1), (3, 5, 17, 19), dtype=jnp.float32)
    y2 = jax.block_until_ready(eltwise_scalars(x2))
    assert jnp.allclose(y2, -1.5 + 2.5 * x2, atol=1e-6, rtol=1e-6)

    print("KERNEL_OK")
</pallas_src>

<mosaic_0001>
module attributes {stable_mosaic.version = 11 : i64} {
  func.func @_eltwise_scalars_kernel(%arg0: i32, %arg1: memref<2x1024xf32, #tpu.memory_space<vmem>>, %arg2: memref<2x1024xf32, #tpu.memory_space<vmem>>) attributes {dimension_semantics = [#tpu.dimension_semantics<parallel>], iteration_bounds = array<i64: 1>, scalar_prefetch = 0 : i64, scratch_operands = 0 : i64, tpu.core_type = #tpu.core_type<tc>, window_params = [{transform_indices = @transform_0, window_bounds = array<i64: 2, 1024>}, {transform_indices = @transform_1, window_bounds = array<i64: 2, 1024>}]} {
    %c0 = arith.constant 0 : index
    %c0_0 = arith.constant 0 : index
    %0 = vector.load %arg1[%c0, %c0_0] : memref<2x1024xf32, #tpu.memory_space<vmem>>, vector<2x1024xf32>
    %cst = arith.constant 2.500000e+00 : f32
    %1 = vector.broadcast %cst : f32 to vector<2x1024xf32>
    %2 = arith.mulf %1, %0 : vector<2x1024xf32>
    %cst_1 = arith.constant -1.500000e+00 : f32
    %3 = vector.broadcast %cst_1 : f32 to vector<2x1024xf32>
    %4 = arith.addf %3, %2 : vector<2x1024xf32>
    %c0_2 = arith.constant 0 : index
    %c0_3 = arith.constant 0 : index
    %5 = vector.load %arg2[%c0_2, %c0_3] : memref<2x1024xf32, #tpu.memory_space<vmem>>, vector<2x1024xf32>
    tpu.vector_store %arg2[%c0_2, %c0_3], %4 {strides = array<i32>} : memref<2x1024xf32, #tpu.memory_space<vmem>>, vector<2x1024xf32>,
    return
  }
  func.func @transform_0(%arg0: i32) -> (i32, i32) {
    %c0_i32 = arith.constant 0 : i32
    %c0_i32_0 = arith.constant 0 : i32
    return %arg0, %c0_i32 : i32, i32
  }
  func.func @transform_1(%arg0: i32) -> (i32, i32) {
    %c0_i32 = arith.constant 0 : i32
    %c0_i32_0 = arith.constant 0 : i32
    return %arg0, %c0_i32 : i32, i32
  }
}

</mosaic_0001>

<llo_original>
// kernel: tpu_custom_call.1
$region0: #{tpu_custom_call.1}
  #allocation0 [shape = 'u32[]', space=smem, size = 0x4, offset = 0x4, fixed_abs, tag = 'smem constant byte address 0x4 - core index']
  #allocation1 [shape = 'u32[72,128]{1,0:T(1,128)}', space=vmem, size = 0x9000, scoped, tag = 'internal scratch']
  %s0 = inlined_call_operand.hbm [shape: f32[2,1024], index: 0, kind: input, shape index: {}]
  %s1 = inlined_call_operand.hbm [shape: f32[2,1024], index: 1, kind: output, shape index: {}]
  %s2 = sld [smem:[#allocation0]]
  $region18: #{tpu_custom_call.1} parent=0
    _
  %s4 = ssub.s32 1, %s2
  %s5 = scalar_select 0, %s4, %s2
  $region1: #{tpu_custom_call.1} parent=0
    #allocation2 [shape = 'u8[8192]{0}', space=vmem, size = 0x2000, scoped, tag = 'input window, operand 0, single buffered']
    #allocation3 [shape = 's32[1]{0}', space=sflag, size = 0x4, scoped, tag = 'scoped memory for tpu_custom_call.1']
    #allocation4 [shape = 's32[1]{0}', space=sflag, size = 0x4, scoped, tag = 'scoped memory for tpu_custom_call.1']
    #allocation5 [shape = 'u8[8192]{0}', space=vmem, size = 0x2000, scoped, tag = 'output window, operand 0, single buffered']
    %6 = vsyncpa [#allocation3], 0
    %7 = vsyncpa [#allocation4], 0
    // Predicated region
    $region2: #{tpu_custom_call.1} parent=1 // pred_check
      _
    $region3: #{tpu_custom_call.1} parent=1 // pred_check_branch
      %9 = sbr.rel (0) target = $region5
    $region4: #{tpu_custom_call.1} parent=1 // pred_region
      %11 = vsyncadd [#allocation3], 0
      %s13 = sshll.u32 %s0, 4
      %s14 = int_to_ptr.hbm [resolvable:$true] %s13
      %s15 = sshll.u32 [#allocation2], 4
      %s16 = int_to_ptr.vmem [resolvable:$true] %s15
      %18 = dma.hbm_to_vmem [thread:$0]  %s14, 256, %s16, [#allocation3]
    $region5: #{tpu_custom_call.1} parent=1 // pred_fallthru
      _
    // Predicated region
    $region6: #{tpu_custom_call.1} parent=1 // pred_check
      _
    $region7: #{tpu_custom_call.1} parent=1 // pred_check_branch
      %20 = sbr.rel (0) target = $region9
    $region8: #{tpu_custom_call.1} parent=1 // pred_region
      %22 = dma.done [#allocation3], 256
    $region9: #{tpu_custom_call.1} parent=1 // pred_fallthru
      _
    %v23 = vld [vmem:[#allocation2] sm:$0xff]
    %v24 = vld [vmem:[#allocation2 + $0x8] sm:$0xff]
    %v25 = vmul.f32 %v23, 2.5
    %v26 = vmul.f32 %v24, 2.5
    %v27 = vadd.f32 %v25, -1.5
    %v28 = vadd.f32 %v26, -1.5
    %29 = vst [vmem:[#allocation5] sm:$0xff] %v27
    %30 = vst [vmem:[#allocation5 + $0x8] sm:$0xff] %v28
    // Predicated region
    $region10: #{tpu_custom_call.1} parent=1 // pred_check
      _
    $region11: #{tpu_custom_call.1} parent=1 // pred_check_branch
      %32 = sbr.rel (0) target = $region13
    $region12: #{tpu_custom_call.1} parent=1 // pred_region
      %34 = vsyncadd [#allocation4], 0
      %s36 = sshll.u32 [#allocation5], 4
      %s37 = int_to_ptr.vmem [resolvable:$true] %s36
      %s38 = sshll.u32 %s1, 4
      %s39 = int_to_ptr.hbm [resolvable:$true] %s38
      %41 = dma.vmem_to_hbm [thread:$0]  %s37, 256, %s39, [#allocation4]
    $region13: #{tpu_custom_call.1} parent=1 // pred_fallthru
      _
    // Predicated region
    $region14: #{tpu_custom_call.1} parent=1 // pred_check
      _
    $region15: #{tpu_custom_call.1} parent=1 // pred_check_branch
      %43 = sbr.rel (0) target = $region17
    $region16: #{tpu_custom_call.1} parent=1 // pred_region
      %45 = dma.done [#allocation4], 256
    $region17: #{tpu_custom_call.1} parent=1 // pred_fallthru
      _
    %46 = vsyncpa [#allocation3], 1
    %47 = vsyncpa [#allocation4], 1

</llo_original>
